<compile_context>
chip_gen: v7x
topology: tpu7x:2x2x1
jax: 0.10.0
libtpu: 0.0.40
codegen_flags: <defaults>
</compile_context>

<pallas_src>
import jax
import jax.numpy as jnp
from jax.experimental import pallas as pl
from jax.experimental.pallas import tpu as pltpu

NEG_INF = -1e30   # finite "minus infinity" (avoids inf-inf corner cases in f32)
LANE = 128
TV = 256          # vocab tile (256-aligned for v6e/v7x MXUs, fine on v5e)
TM_MAX = 512      # max token tile (VMEM-checked: fits v7x's 64 MiB at H<=8K)


def _round_up(x, m):
    return (x + m - 1) // m * m


# ----------------------------------------------------------------------------
# Pallas kernel: online logsumexp over streamed vocab tiles of the tied lm_head
# ----------------------------------------------------------------------------
def lm_lse_kernel(w_ref, h_ref, bias_ref, out_ref, stats_ref):
    """Grid = (token_tiles, vocab_tiles); vocab (last axis) is the reduction.

    w_ref:     (TV, Hp)  bf16  vocab tile of the tied lm_head weight (wte rows)
    h_ref:     (Hp, TM)  bf16  token tile of hidden states (tokens on lanes)
    bias_ref:  (TV, 1)   f32   0 for real vocab rows, NEG_INF for padding rows
    out_ref:   (1, TM)   f32   logsumexp over the vocab per token (lane-dense)
    stats_ref: (2, TM)   f32   row 0 = running max, row 1 = running sum
    """
    j = pl.program_id(1)

    @pl.when(j == 0)
    def _():
        stats_ref[0:1, :] = jnp.full(out_ref.shape, NEG_INF, jnp.float32)
        stats_ref[1:2, :] = jnp.zeros(out_ref.shape, jnp.float32)

    # (TV, TM) logits tile on the MXU with f32 accumulation; vocab-padding rows
    # are pushed to NEG_INF by the additive bias (one vadd, no iota/cmp/select).
    logits = jnp.dot(w_ref[...], h_ref[...],
                     preferred_element_type=jnp.float32) + bias_ref[...]

    # online logsumexp along the vocab (sublane) axis -> lane-dense stats
    m_prev = stats_ref[0:1, :]
    m_new = jnp.maximum(m_prev, jnp.max(logits, axis=0, keepdims=True))
    stats_ref[1:2, :] = (jnp.exp(m_prev - m_new) * stats_ref[1:2, :]
                         + jnp.sum(jnp.exp(logits - m_new), axis=0, keepdims=True))
    stats_ref[0:1, :] = m_new

    @pl.when(j == pl.num_programs(1) - 1)
    def _():
        out_ref[...] = stats_ref[0:1, :] + jnp.log(stats_ref[1:2, :])


# ----------------------------------------------------------------------------
# One-time (outside jit) preparation of the tied lm_head weight for the kernel
# ----------------------------------------------------------------------------
def prepare_lm_head(wte, *, tv=TV):
    """wte (V, H) f32 -> dict with bf16 weight padded to (V_pad, H_pad) plus
    a (V_pad, 1) f32 additive padding bias (0 for real rows, NEG_INF for pad).
    Done ONCE at init so the jitted step never re-casts / re-pads the weight."""
    V, H = wte.shape
    h_pad = _round_up(H, LANE)
    v_pad = _round_up(V, tv)
    w = jnp.pad(wte.astype(jnp.bfloat16), ((0, v_pad - V), (0, h_pad - H)))
    bias = jnp.where(jnp.arange(v_pad) < V, 0.0, NEG_INF).astype(
        jnp.float32).reshape(v_pad, 1)
    return {"w": w, "bias": bias}


# ----------------------------------------------------------------------------
# Pallas wrapper: per-token logsumexp over the full vocabulary
# ----------------------------------------------------------------------------
def lm_logsumexp(h, lm_head, *, tv=TV, tm_max=TM_MAX):
    """h: (N, H) -> (N,) f32 logsumexp_vocab(lm_head @ h)."""
    w, bias = lm_head["w"], lm_head["bias"]
    v_pad, h_pad = w.shape
    N, H = h.shape
    assert H <= h_pad and v_pad % tv == 0

    # biggest token tile the token count supports (weight streamed fewest times)
    tm = min(tm_max, _round_up(N, LANE))
    n_tiles = pl.cdiv(N, tm)
    n_pad = n_tiles * tm
    v_tiles = v_pad // tv

    # tokens on the lane axis (lane-dense stats / output); bf16 MXU inputs;
    # hidden padded to a 128-multiple so vregs/DMAs are full-lane.
    h_t = jnp.pad(h.astype(jnp.bfloat16),
                  ((0, n_pad - N), (0, h_pad - H))).T            # (Hp, Npad)

    # double-buffered working set (bf16 weight + hidden) + logits tile + small
    work_bytes = 2 * 2 * (tv * h_pad + h_pad * tm) + tv * tm * 4 + 4 * (tv + 3 * tm)
    vmem_limit = int(min(60 << 20, max(32 << 20, 2 * work_bytes)))

    out = pl.pallas_call(
        lm_lse_kernel,
        out_shape=jax.ShapeDtypeStruct((1, n_pad), jnp.float32),
        grid_spec=pltpu.PrefetchScalarGridSpec(
            num_scalar_prefetch=0,
            grid=(n_tiles, v_tiles),                       # vocab (reduction) last
            in_specs=[
                pl.BlockSpec((tv, h_pad), lambda i, j: (j, 0)),   # weight tile
                pl.BlockSpec((h_pad, tm), lambda i, j: (0, i)),   # hidden tile
                pl.BlockSpec((tv, 1), lambda i, j: (j, 0)),       # pad bias
            ],
            out_specs=pl.BlockSpec((1, tm), lambda i, j: (0, i)),
            scratch_shapes=[pltpu.VMEM((2, tm), jnp.float32)],    # (max, sum)
        ),
        compiler_params=pltpu.CompilerParams(
            dimension_semantics=("parallel", "arbitrary"),
            vmem_limit_bytes=vmem_limit),
    )(w, h_t, bias)
    return out.reshape(n_pad)[:N]


# ----------------------------------------------------------------------------
# Plain-JAX glue (parameter setup, embedding/MLP stand-ins for encoder/decoder)
# ----------------------------------------------------------------------------
def init_params(key, vocab, hidden, num_codes):
    k = jax.random.split(key, 6)
    s = 0.02
    return {
        "wte": jax.random.normal(k[0], (vocab, hidden), jnp.float32) * s,   # tied lm_head
        "codebook": jax.random.normal(k[1], (num_codes, hidden), jnp.float32) * s,
        "w_enc": jax.random.normal(k[2], (hidden, hidden), jnp.float32) * s,
        "b_enc": jnp.zeros((hidden,), jnp.float32),
        "w_dec": jax.random.normal(k[3], (hidden, hidden), jnp.float32) * s,
        "b_dec": jnp.zeros((hidden,), jnp.float32),
    }


def encode(params, ids):          # stand-in encoder: (B, L) -> (B, L, H)
    x = params["wte"][ids]
    return jnp.tanh(x @ params["w_enc"] + params["b_enc"])


def decode(params, ids):          # stand-in decoder: (B, S) -> (B, S, H)
    x = params["wte"][ids]
    return jnp.tanh(x @ params["w_dec"] + params["b_dec"])


def forward(params, lm_head, event_ids, context_ids, context_ids_random,
            target_ids, posterior):
    B, T = target_ids.shape
    H = params["wte"].shape[1]

    # z = codebook(posterior).detach();  c = encoder(context_ids)[0][:, -1]
    z = jax.lax.stop_gradient(params["codebook"][posterior])   # (B, H)
    c = encode(params, context_ids)[:, -1]                     # (B, H)
    context_loss = jnp.mean((c - z) ** 2, axis=-1)             # (B,)  tiny -> plain JAX

    def hidden_for(ctx_ids):
        inputs_ids = jnp.concatenate([ctx_ids, event_ids, target_ids], -1)
        return decode(params, inputs_ids)[:, -T:][:, :-1]      # (B, T-1, H)

    # fuse both passes (random context + true context) into one kernel launch
    h_all = jnp.concatenate(
        [hidden_for(context_ids_random), hidden_for(context_ids)], axis=0
    ).reshape(-1, H)                                           # (2*B*(T-1), H)
    lbl = target_ids[:, 1:].reshape(-1)
    lbl_all = jnp.concatenate([lbl, lbl], axis=0)

    # logsumexp over the full vocab: the fused Pallas kernel
    lse = lm_logsumexp(h_all, lm_head)                         # (2*B*(T-1),)

    # label logit = wte[label] . h  — cheap row-wise dot outside the vocab loop
    w_lbl = lm_head["w"][lbl_all, :H].astype(jnp.float32)      # (N, H)
    h_b = h_all.astype(jnp.bfloat16).astype(jnp.float32)       # match kernel inputs
    label_logit = jnp.sum(h_b * w_lbl, axis=-1)                # (N,)

    logp = (label_logit - lse).reshape(2, B, T - 1)
    labels_logits_1, labels_logits_2 = logp[0], logp[1]

    active = (target_ids != 0)[:, 1:].astype(jnp.float32)      # (B, T-1)
    sum_logp_1 = (labels_logits_1 * active).sum(1)
    sum_logp_2 = (labels_logits_2 * active).sum(1)

    active_sum = active.sum()
    # CrossEntropyLoss over active positions == -mean(label logprob) over them
    loss = -(labels_logits_2 * active).sum() / active_sum

    # prob_2 > prob_1  <=>  sum of log-probs comparison (no underflow)
    reward = (sum_logp_2 > sum_logp_1).astype(jnp.float32) * 2.0 - 1.0
    context_loss_m = jnp.mean(reward * context_loss)

    return (loss, context_loss_m, reward.mean()), loss * active_sum, active_sum


# ----------------------------------------------------------------------------
if __name__ == "__main__":
    B, L, E, T = 2, 8, 6, 8          # batch, context len, event len, target len
    H, V, NUM_CODES = 32, 512, 16    # hidden, vocab, codebook size

    key = jax.random.PRNGKey(0)
    kp, k1, k2, k3, k4, k5 = jax.random.split(key, 6)
    params = init_params(kp, V, H, NUM_CODES)
    lm_head = prepare_lm_head(params["wte"])   # bf16 + pad ONCE, outside the step

    context_ids = jax.random.randint(k1, (B, L), 1, V, jnp.int32)
    context_ids_random = jax.random.randint(k2, (B, L), 1, V, jnp.int32)
    event_ids = jax.random.randint(k3, (B, E), 1, V, jnp.int32)
    target_ids = jax.random.randint(k4, (B, T), 1, V, jnp.int32)
    # emulate padded targets (ignored positions) and a sos token
    target_ids = target_ids.at[:, 0].set(1)
    target_ids = target_ids.at[0, -2:].set(0)
    posterior = jax.random.randint(k5, (B,), 0, NUM_CODES, jnp.int32)

    (loss, ctx_loss, reward_mean), scaled_loss, n_active = jax.block_until_ready(
        jax.jit(forward)(params, lm_head, event_ids, context_ids,
                         context_ids_random, target_ids, posterior)
    )

    assert jnp.isfinite(loss) and jnp.isfinite(ctx_loss) and jnp.isfinite(scaled_loss)
    assert loss > 0.0
    print("KERNEL_OK")
</pallas_src>

<mosaic_0001>
module attributes {stable_mosaic.version = 11 : i64} {
  func.func @lm_lse_kernel(%arg0: i32, %arg1: i32, %arg2: memref<256x128xbf16, #tpu.memory_space<vmem>>, %arg3: memref<128x128xbf16, #tpu.memory_space<vmem>>, %arg4: memref<256x1xf32, #tpu.memory_space<vmem>>, %arg5: memref<1x128xf32, #tpu.memory_space<vmem>>, %arg6: memref<2x128xf32, #tpu.memory_space<vmem>>) attributes {dimension_semantics = [#tpu.dimension_semantics<parallel>, #tpu.dimension_semantics<arbitrary>], iteration_bounds = array<i64: 1, 2>, scalar_prefetch = 0 : i64, scratch_operands = 1 : i64, tpu.core_type = #tpu.core_type<tc>, window_params = [{transform_indices = @transform_0, window_bounds = array<i64: 256, 128>}, {transform_indices = @transform_1, window_bounds = array<i64: 128, 128>}, {transform_indices = @transform_2, window_bounds = array<i64: 256, 1>}, {transform_indices = @transform_3, window_bounds = array<i64: 1, 128>}]} {
    %c0_i32 = arith.constant 0 : i32
    %0 = arith.cmpi eq, %arg1, %c0_i32 : i32
    %1 = arith.extui %0 : i1 to i32
    %c0_i32_0 = arith.constant 0 : i32
    %2 = arith.cmpi ne, %1, %c0_i32_0 : i32
    scf.if %2 {
      %cst_16 = arith.constant -1.000000e+30 : f32
      %28 = vector.broadcast %cst_16 : f32 to vector<1x128xf32>
      %c0_17 = arith.constant 0 : index
      %c0_18 = arith.constant 0 : index
      %29 = vector.load %arg6[%c0_17, %c0_18] : memref<2x128xf32, #tpu.memory_space<vmem>>, vector<1x128xf32>
      tpu.vector_store %arg6[%c0_17, %c0_18], %28 {strides = array<i32>} : memref<2x128xf32, #tpu.memory_space<vmem>>, vector<1x128xf32>,
      %cst_19 = arith.constant 0.000000e+00 : f32
      %30 = vector.broadcast %cst_19 : f32 to vector<1x128xf32>
      %c1_20 = arith.constant 1 : index
      %c0_21 = arith.constant 0 : index
      %31 = vector.load %arg6[%c1_20, %c0_21] : memref<2x128xf32, #tpu.memory_space<vmem>>, vector<1x128xf32>
      tpu.vector_store %arg6[%c1_20, %c0_21], %30 {strides = array<i32>} : memref<2x128xf32, #tpu.memory_space<vmem>>, vector<1x128xf32>,
    } else {
    }
    %c0 = arith.constant 0 : index
    %c0_1 = arith.constant 0 : index
    %3 = vector.load %arg2[%c0, %c0_1] : memref<256x128xbf16, #tpu.memory_space<vmem>>, vector<256x128xbf16>
    %c0_2 = arith.constant 0 : index
    %c0_3 = arith.constant 0 : index
    %4 = vector.load %arg3[%c0_2, %c0_3] : memref<128x128xbf16, #tpu.memory_space<vmem>>, vector<128x128xbf16>
    %cst = arith.constant dense<0.000000e+00> : vector<256x128xf32>
    %5 = tpu.matmul %3, %4, %cst {dimension_numbers = #tpu.dot_dimension_numbers<[1], [0], [0], [1], [0, 0, 1, 1], [], []>} : vector<256x128xbf16>, vector<128x128xbf16>, vector<256x128xf32> -> vector<256x128xf32>
    %c0_4 = arith.constant 0 : index
    %c0_5 = arith.constant 0 : index
    %6 = vector.load %arg4[%c0_4, %c0_5] : memref<256x1xf32, #tpu.memory_space<vmem>>, vector<256x1xf32>
    %7 = vector.broadcast %6 : vector<256x1xf32> to vector<256x128xf32>
    %8 = arith.addf %5, %7 : vector<256x128xf32>
    %c0_6 = arith.constant 0 : index
    %c0_7 = arith.constant 0 : index
    %9 = vector.load %arg6[%c0_6, %c0_7] : memref<2x128xf32, #tpu.memory_space<vmem>>, vector<1x128xf32>
    %cst_8 = arith.constant dense<0xFF800000> : vector<128xf32>
    %10 = vector.multi_reduction <maximumf>, %8, %cst_8 [0] : vector<256x128xf32> to vector<128xf32>
    %11 = vector.shape_cast %10 : vector<128xf32> to vector<1x128xf32>
    %12 = arith.maximumf %9, %11 : vector<1x128xf32>
    %13 = arith.subf %9, %12 : vector<1x128xf32>
    %14 = math.exp %13 : vector<1x128xf32>
    %c1 = arith.constant 1 : index
    %c0_9 = arith.constant 0 : index
    %15 = vector.load %arg6[%c1, %c0_9] : memref<2x128xf32, #tpu.memory_space<vmem>>, vector<1x128xf32>
    %16 = arith.mulf %14, %15 : vector<1x128xf32>
    %17 = vector.broadcast %12 : vector<1x128xf32> to vector<256x128xf32>
    %18 = arith.subf %8, %17 : vector<256x128xf32>
    %19 = math.exp %18 : vector<256x128xf32>
    %cst_10 = arith.constant dense<0.000000e+00> : vector<128xf32>
    %20 = vector.multi_reduction <add>, %19, %cst_10 [0] : vector<256x128xf32> to vector<128xf32>
    %21 = vector.shape_cast %20 : vector<128xf32> to vector<1x128xf32>
    %22 = arith.addf %16, %21 : vector<1x128xf32>
    %c1_11 = arith.constant 1 : index
    %c0_12 = arith.constant 0 : index
    %23 = vector.load %arg6[%c1_11, %c0_12] : memref<2x128xf32, #tpu.memory_space<vmem>>, vector<1x128xf32>
    tpu.vector_store %arg6[%c1_11, %c0_12], %22 {strides = array<i32>} : memref<2x128xf32, #tpu.memory_space<vmem>>, vector<1x128xf32>,
    %c0_13 = arith.constant 0 : index
    %c0_14 = arith.constant 0 : index
    %24 = vector.load %arg6[%c0_13, %c0_14] : memref<2x128xf32, #tpu.memory_space<vmem>>, vector<1x128xf32>
    tpu.vector_store %arg6[%c0_13, %c0_14], %12 {strides = array<i32>} : memref<2x128xf32, #tpu.memory_space<vmem>>, vector<1x128xf32>,
    %c1_i32 = arith.constant 1 : i32
    %25 = arith.cmpi eq, %arg1, %c1_i32 : i32
    %26 = arith.extui %25 : i1 to i32
    %c0_i32_15 = arith.constant 0 : i32
    %27 = arith.cmpi ne, %26, %c0_i32_15 : i32
    scf.if %27 {
      %c0_16 = arith.constant 0 : index
      %c0_17 = arith.constant 0 : index
      %28 = vector.load %arg6[%c0_16, %c0_17] : memref<2x128xf32, #tpu.memory_space<vmem>>, vector<1x128xf32>
      %c1_18 = arith.constant 1 : index
      %c0_19 = arith.constant 0 : index
      %29 = vector.load %arg6[%c1_18, %c0_19] : memref<2x128xf32, #tpu.memory_space<vmem>>, vector<1x128xf32>
      %30 = math.log %29 : vector<1x128xf32>
      %31 = arith.addf %28, %30 : vector<1x128xf32>
      %c0_20 = arith.constant 0 : index
      %c0_21 = arith.constant 0 : index
      %32 = vector.load %arg5[%c0_20, %c0_21] : memref<1x128xf32, #tpu.memory_space<vmem>>, vector<1x128xf32>
      tpu.vector_store %arg5[%c0_20, %c0_21], %31 {strides = array<i32>} : memref<1x128xf32, #tpu.memory_space<vmem>>, vector<1x128xf32>,
    } else {
    }
    return
  }
  func.func @transform_0(%arg0: i32, %arg1: i32) -> (i32, i32) {
    %c0_i32 = arith.constant 0 : i32
    %c0_i32_0 = arith.constant 0 : i32
    return %arg1, %c0_i32 : i32, i32
  }
  func.func @transform_1(%arg0: i32, %arg1: i32) -> (i32, i32) {
    %c0_i32 = arith.constant 0 : i32
    %c0_i32_0 = arith.constant 0 : i32
    return %c0_i32, %arg0 : i32, i32
  }
  func.func @transform_2(%arg0: i32, %arg1: i32) -> (i32, i32) {
    %c0_i32 = arith.constant 0 : i32
    %c0_i32_0 = arith.constant 0 : i32
    return %arg1, %c0_i32 : i32, i32
  }
  func.func @transform_3(%arg0: i32, %arg1: i32) -> (i32, i32) {
    %c0_i32 = arith.constant 0 : i32
    %c0_i32_0 = arith.constant 0 : i32
    return %c0_i32, %arg0 : i32, i32
  }
}

</mosaic_0001>

<llo_original>
// kernel: custom-call.8
$region0: #{custom-call.8}
  %s0 = inlined_call_operand.vmem [shape: bf16[28,32], index: 0, kind: output, shape index: {}]

// kernel: sub.1
$region0: #{sub.1}
  #allocation0 [shape = 's32[1]{0}', space=sflag, size = 0x4, scoped, tag = 'scoped memory for sub.1']
  %s0 = inlined_call_operand.vmem [shape: f32[4,7], index: 0, kind: input, shape index: {}]
  %s1 = inlined_call_operand.vmem [shape: f32[4,7], index: 1, kind: input, shape index: {}]
  %s2 = inlined_call_operand.vmem [shape: f32[4,7], index: 2, kind: output, shape index: {}]
  %v3 = vld [vmem:[%s0] sm:$0xf]
  %v4 = vld [vmem:[%s1] sm:$0xf]
  %5 = xla_tuple %v3, %v4
  %6 = xla_tuple %5
  %v7 = vsub.f32 %v3, %v4
  %8 = xla_tuple %v7
  %9 = vst [vmem:[%s2] sm:$0xf] %v7

// kernel: forward.1
$region0: #{forward.1}
  #allocation0 [shape = 'u32[]', space=smem, size = 0x4, offset = 0x4, fixed_abs, tag = 'smem constant byte address 0x4 - core index']
  #allocation1 [shape = 'u32[144,128]{1,0:T(1,128)}', space=vmem, size = 0x12000, scoped, tag = 'internal scratch']
  #allocation2 [shape = 'f32[2,128]{1,0:T(2,128)}', space=vmem, size = 0x400, scoped, tag = 'scratch operand']
  %s0 = inlined_call_operand.vmem [shape: bf16[512,128], index: 0, kind: input, shape index: {}]
  %s1 = inlined_call_operand.vmem [shape: bf16[128,128], index: 1, kind: input, shape index: {}]
  %s2 = inlined_call_operand.vmem [shape: f32[512,1], index: 2, kind: input, shape index: {}]
  %s3 = inlined_call_operand.vmem [shape: f32[1,128], index: 3, kind: output, shape index: {}]
  %s4 = sld [smem:[#allocation0]]
  $region53: #{forward.1} parent=0
    _
  %s6 = ssub.s32 1, %s4
  %s7 = scalar_select 0, %s6, %s4
  loop: start=0, step=1, limit=4
  $region2: #{forward.1} parent=0 // loop_pre_header
    _
  $region3: #{forward.1} parent=0 // loop_header
    %s9 = sphi 0, %s13
    %p10 = scmp.ge.s32.totalorder %s9, 4
    %s16 = sphi 0, %s28
    %s17 = sphi 0, %s24
    %s18 = sphi 0, %s16
    %s19 = sphi 0, %s17
    %s20 = sphi 0, %s18
    %s21 = sphi 0, %s19
    %s31 = sphi 0, %s33
    %s34 = sphi 0, %s31
    %s35 = sphi 0, %s34
    %s51 = sphi 0, %s35
    %s57 = sphi 0, %s59
    %s60 = sphi 0, %s57
    %s61 = sphi 0, %s60
    %s77 = sphi 0, %s61
    %s83 = sphi 0, %s85
    %s86 = sphi 0, %s83
    %s87 = sphi 0, %s86
    %s103 = sphi 0, %s87
    %s109 = sphi 0, %s111
    %s112 = sphi 0, %s109
    %s113 = sphi 0, %s112
    %s129 = sphi 0, %s113
  $region4: #{forward.1} parent=0 // loop_header_branch
    %12 = sbr.rel (%p10) target = $region8
  $region5: #{forward.1} parent=0 // loop_body
    %s14 = ssub.s32 %s9, 1
    %s15 = ssub.s32 %s9, 2
    %s22 = sadd.s32 1, %s17
    %p23 = scmp.ge.s32.totalorder %s22, 2
    %s24 = scalar_select %p23, 0, %s22
    %s25 = sadd.s32 1, %s16
    %s26 = scalar_select %p23, %s25, %s16
    %p27 = scmp.ge.s32.totalorder %s26, 1
    %s28 = scalar_select %p27, 0, %s26
    %s29 = ssub.s32 %s17, %s24
    %p30 = scmp.eq.s32.totalorder %s29, 0
    %s32 = sadd.s32 %s31, 1
    %s33 = scalar_select %p30, %s31, %s32
    %p36 = pneg %p30
    %p37 = scmp.eq.s32.totalorder %s9, 1
    %p38 = por %p36, %p37
    %p39 = scmp.ne.s32.totalorder %s31, %s34
    %p40 = scmp.eq.s32.totalorder %s9, 0
    %p41 = por %p39, %p40
    %p42 = scmp.ne.s32.totalorder %s31, %s34
    %p43 = scmp.eq.s32.totalorder %s14, 1
    %p44 = por %p42, %p43
    %p45 = scmp.ne.s32.totalorder %s34, %s35
    %p46 = scmp.eq.s32.totalorder %s14, 0
    %p47 = por %p45, %p46
    %p48 = scmp.ne.s32.totalorder %s34, %s35
    %p49 = scmp.eq.s32.totalorder %s15, 1
    %p50 = por %p48, %p49
    %p52 = scmp.ne.s32.totalorder %s35, %s51
    %p53 = scmp.eq.s32.totalorder %s15, 0
    %p54 = por %p52, %p53
    %s55 = ssub.s32 %s16, %s28
    %p56 = scmp.eq.s32.totalorder %s55, 0
    %s58 = sadd.s32 %s57, 1
    %s59 = scalar_select %p56, %s57, %s58
    %p62 = pneg %p56
    %p63 = scmp.eq.s32.totalorder %s9, 1
    %p64 = por %p62, %p63
    %p65 = scmp.ne.s32.totalorder %s57, %s60
    %p66 = scmp.eq.s32.totalorder %s9, 0
    %p67 = por %p65, %p66
    %p68 = scmp.ne.s32.totalorder %s57, %s60
    %p69 = scmp.eq.s32.totalorder %s14, 1
    %p70 = por %p68, %p69
    %p71 = scmp.ne.s32.totalorder %s60, %s61
    %p72 = scmp.eq.s32.totalorder %s14, 0
    %p73 = por %p71, %p72
    %p74 = scmp.ne.s32.totalorder %s60, %s61
    %p75 = scmp.eq.s32.totalorder %s15, 1
    %p76 = por %p74, %p75
    %p78 = scmp.ne.s32.totalorder %s61, %s77
    %p79 = scmp.eq.s32.totalorder %s15, 0
    %p80 = por %p78, %p79
    %s81 = ssub.s32 %s17, %s24
    %p82 = scmp.eq.s32.totalorder %s81, 0
    %s84 = sadd.s32 %s83, 1
    %s85 = scalar_select %p82, %s83, %s84
    %p88 = pneg %p82
    %p89 = scmp.eq.s32.totalorder %s9, 1
    %p90 = por %p88, %p89
    %p91 = scmp.ne.s32.totalorder %s83, %s86
    %p92 = scmp.eq.s32.totalorder %s9, 0
    %p93 = por %p91, %p92
    %p94 = scmp.ne.s32.totalorder %s83, %s86
    %p95 = scmp.eq.s32.totalorder %s14, 1
    %p96 = por %p94, %p95
    %p97 = scmp.ne.s32.totalorder %s86, %s87
    %p98 = scmp.eq.s32.totalorder %s14, 0
    %p99 = por %p97, %p98
    %p100 = scmp.ne.s32.totalorder %s86, %s87
    %p101 = scmp.eq.s32.totalorder %s15, 1
    %p102 = por %p100, %p101
    %p104 = scmp.ne.s32.totalorder %s87, %s103
    %p105 = scmp.eq.s32.totalorder %s15, 0
    %p106 = por %p104, %p105
    %s107 = ssub.s32 %s16, %s28
    %p108 = scmp.eq.s32.totalorder %s107, 0
    %s110 = sadd.s32 %s109, 1
    %s111 = scalar_select %p108, %s109, %s110
    %p114 = pneg %p108
    %p115 = scmp.eq.s32.totalorder %s9, 1
    %p116 = por %p114, %p115
    %p117 = scmp.ne.s32.totalorder %s109, %s112
    %p118 = scmp.eq.s32.totalorder %s9, 0
    %p119 = por %p117, %p118
    %p120 = scmp.ne.s32.totalorder %s109, %s112
    %p121 = scmp.eq.s32.totalorder %s14, 1
    %p122 = por %p120, %p121
    %p123 = scmp.ne.s32.totalorder %s112, %s113
    %p124 = scmp.eq.s32.totalorder %s14, 0
    %p125 = por %p123, %p124
    %p126 = scmp.ne.s32.totalorder %s112, %s113
    %p127 = scmp.eq.s32.totalorder %s15, 1
    %p128 = por %p126, %p127
    %p130 = scmp.ne.s32.totalorder %s113, %s129
    %p131 = scmp.eq.s32.totalorder %s15, 0
    %p132 = por %p130, %p131
    %p133 = scmp.le.s32.totalorder 1, %s9
    %p134 = scmp.lt.s32.totalorder %s9, 3
    %p135 = pnand %p133, %p134
    %p136 = pneg %p135
    // Predicated region
    $region9: #{forward.1} parent=5 // pred_check
      _
    $region10: #{forward.1} parent=5 // pred_check_branch
      %138 = sbr.rel (%p135) target = $region12
    $region11: #{forward.1} parent=5 // pred_region
      %s139 = ssub.s32 %s9, 1
      // Predicated region
      $region13: #{forward.1} parent=11 // pred_check
        %p140 = pneg %p73
      $region14: #{forward.1} parent=11 // pred_check_branch
        %142 = sbr.rel (%p140) target = $region16
      $region15: #{forward.1} parent=11 // pred_region
        %p143 = scmp.lt.s32.totalorder %s18, 0
        %s144 = scalar_select %p143, %s18, 0
        %s145 = smul.addr %s144, 4
        %s146 = scalar_lea.vmem %s1, %s145
      $region16: #{forward.1} parent=11 // pred_fallthru
        _
    $region12: #{forward.1} parent=5 // pred_fallthru
      _
    %p147 = scmp.lt.s32.totalorder %s9, 2
    // Predicated region
    $region17: #{forward.1} parent=5 // pred_check
      %p148 = pneg %p147
    $region18: #{forward.1} parent=5 // pred_check_branch
      %150 = sbr.rel (%p148) target = $region20
    $region19: #{forward.1} parent=5 // pred_region
      // Predicated region
      $region21: #{forward.1} parent=19 // pred_check
        %p151 = pneg %p41
      $region22: #{forward.1} parent=19 // pred_check_branch
        %153 = sbr.rel (%p151) target = $region24
      $region23: #{forward.1} parent=19 // pred_region
        %s154 = smul.u32 32, %s17
        %p155 = scmp.lt.s32.totalorder %s154, 63
        %s156 = scalar_select %p155, %s154, 63
        %s157 = smul.addr %s156, 4
        %s158 = scalar_lea.vmem %s0, %s157
        %s159 = smul.u32 32, %s17
      $region24: #{forward.1} parent=19 // pred_fallthru
        _
      // Predicated region
      $region25: #{forward.1} parent=19 // pred_check
        %p160 = pneg %p93
      $region26: #{forward.1} parent=19 // pred_check_branch
        %162 = sbr.rel (%p160) target = $region28
      $region27: #{forward.1} parent=19 // pred_region
        %s163 = smul.u32 32, %s17
        %p164 = scmp.lt.s32.totalorder %s163, 63
        %s165 = scalar_select %p164, %s163, 63
        %s166 = smul.addr %s165, 8
        %s167 = scalar_lea.vmem %s2, %s166
        %s168 = smul.u32 32, %s17
      $region28: #{forward.1} parent=19 // pred_fallthru
        _
    $region20: #{forward.1} parent=5 // pred_fallthru
      _
    %p169 = scmp.le.s32.totalorder 1, %s9
    %p170 = scmp.lt.s32.totalorder %s9, 3
    %p171 = pnand %p169, %p170
    %p172 = pneg %p171
    // Predicated region
    $region29: #{forward.1} parent=5 // pred_check
      _
    $region30: #{forward.1} parent=5 // pred_check_branch
      %174 = sbr.rel (%p171) target = $region32
    $region31: #{forward.1} parent=5 // pred_region
      %s175 = ssub.s32 %s9, 1
      %s176 = smul.u32 32, %s19
      %p177 = scmp.lt.s32.totalorder %s176, 63
      %s178 = scalar_select %p177, %s176, 63
      %s179 = smul.addr %s178, 4
      %s180 = scalar_lea.vmem %s0, %s179
      %p181 = pneg %p47
      %p182 = pneg %p44
      %p183 = scmp.lt.s32.totalorder %s18, 0
      %s184 = scalar_select %p183, %s18, 0
      %s185 = smul.addr %s184, 4
      %s186 = scalar_lea.vmem %s1, %s185
      %p187 = pneg %p73
      %p188 = pneg %p70
      %s189 = smul.u32 32, %s19
      %p190 = scmp.lt.s32.totalorder %s189, 63
      %s191 = scalar_select %p190, %s189, 63
      %s192 = smul.addr %s191, 8
      %s193 = scalar_lea.vmem %s2, %s192
      %p194 = pneg %p99
      %p195 = pneg %p96
      %p196 = pneg %p125
      %p197 = pneg %p122
      %p198 = scmp.lt.s32.totalorder %s18, 0
      %s199 = scalar_select %p198, %s18, 0
      %s200 = scalar_lea.vmem %s3, %s199
      %s201 = smul.u32 32, %s19
      %p202 = scmp.lt.s32.totalorder %s201, 63
      %s203 = scalar_select %p202, %s201, 63
      %s204 = smul.addr %s203, 4
      %s205 = scalar_lea.vmem %s0, %s204
      %s206 = smul.u32 32, %s19
      %p207 = scmp.lt.s32.totalorder %s18, 0
      %s208 = scalar_select %p207, %s18, 0
      %s209 = smul.addr %s208, 4
      %s210 = scalar_lea.vmem %s1, %s209
      %s211 = smul.u32 32, %s19
      %p212 = scmp.lt.s32.totalorder %s211, 63
      %s213 = scalar_select %p212, %s211, 63
      %s214 = smul.addr %s213, 8
      %s215 = scalar_lea.vmem %s2, %s214
      %s216 = smul.u32 32, %s19
      %p217 = scmp.lt.s32.totalorder %s18, 0
      %s218 = scalar_select %p217, %s18, 0
      %s219 = scalar_lea.vmem %s3, %s218
      %p221 = scmp.eq.s32.totalorder %s19, 0
      // Predicated region
      $region33: #{forward.1} parent=31 // pred_check
        %p222 = pneg %p221
      $region34: #{forward.1} parent=31 // pred_check_branch
        %224 = sbr.rel (%p222) target = $region36
      $region35: #{forward.1} parent=31 // pred_region
        %225 = vst [vmem:[#allocation2] sm:$0x1] -1e+30
        %226 = vst [vmem:[#allocation2 + $0x1] sm:$0x1] 0.0
      $region36: #{forward.1} parent=31 // pred_fallthru
        _
      %v227 = vld [vmem:[%s205] sm:$0xf]
      %v228 = vld [vmem:[%s205 + $0x4] sm:$0xf]
      %v229 = vld [vmem:[%s205 + $0x8] sm:$0xf]
      %v230 = vld [vmem:[%s205 + $0xc] sm:$0xf]
      %v231 = vld [vmem:[%s205 + $0x10] sm:$0xf]
      %v232 = vld [vmem:[%s205 + $0x14] sm:$0xf]
      %v233 = vld [vmem:[%s205 + $0x18] sm:$0xf]
      %v234 = vld [vmem:[%s205 + $0x1c] sm:$0xf]
      %v235 = vld [vmem:[%s205 + $0x20] sm:$0xf]
      %v236 = vld [vmem:[%s205 + $0x24] sm:$0xf]
      %v237 = vld [vmem:[%s205 + $0x28] sm:$0xf]
      %v238 = vld [vmem:[%s205 + $0x2c] sm:$0xf]
      %v239 = vld [vmem:[%s205 + $0x30] sm:$0xf]
      %v240 = vld [vmem:[%s205 + $0x34] sm:$0xf]
      %v241 = vld [vmem:[%s205 + $0x38] sm:$0xf]
      %v242 = vld [vmem:[%s205 + $0x3c] sm:$0xf]
      %v243 = vld [vmem:[%s205 + $0x40] sm:$0xf]
      %v244 = vld [vmem:[%s205 + $0x44] sm:$0xf]
      %v245 = vld [vmem:[%s205 + $0x48] sm:$0xf]
      %v246 = vld [vmem:[%s205 + $0x4c] sm:$0xf]
      %v247 = vld [vmem:[%s205 + $0x50] sm:$0xf]
      %v248 = vld [vmem:[%s205 + $0x54] sm:$0xf]
      %v249 = vld [vmem:[%s205 + $0x58] sm:$0xf]
      %v250 = vld [vmem:[%s205 + $0x5c] sm:$0xf]
      %v251 = vld [vmem:[%s205 + $0x60] sm:$0xf]
      %v252 = vld [vmem:[%s205 + $0x64] sm:$0xf]
      %v253 = vld [vmem:[%s205 + $0x68] sm:$0xf]
      %v254 = vld [vmem:[%s205 + $0x6c] sm:$0xf]
      %v255 = vld [vmem:[%s205 + $0x70] sm:$0xf]
      %v256 = vld [vmem:[%s205 + $0x74] sm:$0xf]
      %v257 = vld [vmem:[%s205 + $0x78] sm:$0xf]
      %v258 = vld [vmem:[%s205 + $0x7c] sm:$0xf]
      %v259 = vld [vmem:[%s210] sm:$0xf]
      %v260 = vld [vmem:[%s210 + $0x4] sm:$0xf]
      %v261 = vld [vmem:[%s210 + $0x8] sm:$0xf]
      %v262 = vld [vmem:[%s210 + $0xc] sm:$0xf]
      %v263 = vld [vmem:[%s210 + $0x10] sm:$0xf]
      %v264 = vld [vmem:[%s210 + $0x14] sm:$0xf]
      %v265 = vld [vmem:[%s210 + $0x18] sm:$0xf]
      %v266 = vld [vmem:[%s210 + $0x1c] sm:$0xf]
      %v267 = vld [vmem:[%s210 + $0x20] sm:$0xf]
      %v268 = vld [vmem:[%s210 + $0x24] sm:$0xf]
      %v269 = vld [vmem:[%s210 + $0x28] sm:$0xf]
      %v270 = vld [vmem:[%s210 + $0x2c] sm:$0xf]
      %v271 = vld [vmem:[%s210 + $0x30] sm:$0xf]
      %v272 = vld [vmem:[%s210 + $0x34] sm:$0xf]
      %v273 = vld [vmem:[%s210 + $0x38] sm:$0xf]
      %v274 = vld [vmem:[%s210 + $0x3c] sm:$0xf]
      %v275 = vld [vmem:[%s215] sm:$0xff]
      %v276 = vld [vmem:[%s215 + $0x8] sm:$0xff]
      %v277 = vld [vmem:[%s215 + $0x10] sm:$0xff]
      %v278 = vld [vmem:[%s215 + $0x18] sm:$0xff]
      %v279 = vld [vmem:[%s215 + $0x20] sm:$0xff]
      %v280 = vld [vmem:[%s215 + $0x28] sm:$0xff]
      %v281 = vld [vmem:[%s215 + $0x30] sm:$0xff]
      %v282 = vld [vmem:[%s215 + $0x38] sm:$0xff]
      %v283 = vld [vmem:[%s215 + $0x40] sm:$0xff]
      %v284 = vld [vmem:[%s215 + $0x48] sm:$0xff]
      %v285 = vld [vmem:[%s215 + $0x50] sm:$0xff]
      %v286 = vld [vmem:[%s215 + $0x58] sm:$0xff]
      %v287 = vld [vmem:[%s215 + $0x60] sm:$0xff]
      %v288 = vld [vmem:[%s215 + $0x68] sm:$0xff]
      %v289 = vld [vmem:[%s215 + $0x70] sm:$0xff]
      %v290 = vld [vmem:[%s215 + $0x78] sm:$0xff]
      %v291 = vld [vmem:[%s215 + $0x80] sm:$0xff]
      %v292 = vld [vmem:[%s215 + $0x88] sm:$0xff]
      %v293 = vld [vmem:[%s215 + $0x90] sm:$0xff]
      %v294 = vld [vmem:[%s215 + $0x98] sm:$0xff]
      %v295 = vld [vmem:[%s215 + $0xa0] sm:$0xff]
      %v296 = vld [vmem:[%s215 + $0xa8] sm:$0xff]
      %v297 = vld [vmem:[%s215 + $0xb0] sm:$0xff]
      %v298 = vld [vmem:[%s215 + $0xb8] sm:$0xff]
      %v299 = vld [vmem:[%s215 + $0xc0] sm:$0xff]
      %v300 = vld [vmem:[%s215 + $0xc8] sm:$0xff]
      %v301 = vld [vmem:[%s215 + $0xd0] sm:$0xff]
      %v302 = vld [vmem:[%s215 + $0xd8] sm:$0xff]
      %v303 = vld [vmem:[%s215 + $0xe0] sm:$0xff]
      %v304 = vld [vmem:[%s215 + $0xe8] sm:$0xff]
      %v305 = vld [vmem:[%s215 + $0xf0] sm:$0xff]
      %v306 = vld [vmem:[%s215 + $0xf8] sm:$0xff]
      %308 = vset.pattern.permute.xlu0 0
      %309 = vperm.xlu0 %308, %v275
      %v310 = vpop.permute.xlu0 %309
      %313 = vset.pattern.permute.xlu0 0
      %314 = vperm.xlu0 %313, %v276
      %v315 = vpop.permute.xlu0 %314
      %318 = vset.pattern.permute.xlu0 0
      %319 = vperm.xlu0 %318, %v277
      %v320 = vpop.permute.xlu0 %319
      %323 = vset.pattern.permute.xlu0 0
      %324 = vperm.xlu0 %323, %v278
      %v325 = vpop.permute.xlu0 %324
      %328 = vset.pattern.permute.xlu0 0
      %329 = vperm.xlu0 %328, %v279
      %v330 = vpop.permute.xlu0 %329
      %333 = vset.pattern.permute.xlu0 0
      %334 = vperm.xlu0 %333, %v280
      %v335 = vpop.permute.xlu0 %334
      %338 = vset.pattern.permute.xlu0 0
      %339 = vperm.xlu0 %338, %v281
      %v340 = vpop.permute.xlu0 %339
      %343 = vset.pattern.permute.xlu0 0
      %344 = vperm.xlu0 %343, %v282
      %v345 = vpop.permute.xlu0 %344
      %348 = vset.pattern.permute.xlu0 0
      %349 = vperm.xlu0 %348, %v283
      %v350 = vpop.permute.xlu0 %349
      %353 = vset.pattern.permute.xlu0 0
      %354 = vperm.xlu0 %353, %v284
      %v355 = vpop.permute.xlu0 %354
      %358 = vset.pattern.permute.xlu0 0
      %359 = vperm.xlu0 %358, %v285
      %v360 = vpop.permute.xlu0 %359
      %363 = vset.pattern.permute.xlu0 0
      %364 = vperm.xlu0 %363, %v286
      %v365 = vpop.permute.xlu0 %364
      %368 = vset.pattern.permute.xlu0 0
      %369 = vperm.xlu0 %368, %v287
      %v370 = vpop.permute.xlu0 %369
      %373 = vset.pattern.permute.xlu0 0
      %374 = vperm.xlu0 %373, %v288
      %v375 = vpop.permute.xlu0 %374
      %378 = vset.pattern.permute.xlu0 0
      %379 = vperm.xlu0 %378, %v289
      %v380 = vpop.permute.xlu0 %379
      %383 = vset.pattern.permute.xlu0 0
      %384 = vperm.xlu0 %383, %v290
      %v385 = vpop.permute.xlu0 %384
      %388 = vset.pattern.permute.xlu0 0
      %389 = vperm.xlu0 %388, %v291
      %v390 = vpop.permute.xlu0 %389
      %393 = vset.pattern.permute.xlu0 0
      %394 = vperm.xlu0 %393, %v292
      %v395 = vpop.permute.xlu0 %394
      %398 = vset.pattern.permute.xlu0 0
      %399 = vperm.xlu0 %398, %v293
      %v400 = vpop.permute.xlu0 %399
      %403 = vset.pattern.permute.xlu0 0
      %404 = vperm.xlu0 %403, %v294
      %v405 = vpop.permute.xlu0 %404
      %408 = vset.pattern.permute.xlu0 0
      %409 = vperm.xlu0 %408, %v295
      %v410 = vpop.permute.xlu0 %409
      %413 = vset.pattern.permute.xlu0 0
      %414 = vperm.xlu0 %413, %v296
      %v415 = vpop.permute.xlu0 %414
      %418 = vset.pattern.permute.xlu0 0
      %419 = vperm.xlu0 %418, %v297
      %v420 = vpop.permute.xlu0 %419
      %423 = vset.pattern.permute.xlu0 0
      %424 = vperm.xlu0 %423, %v298
      %v425 = vpop.permute.xlu0 %424
      %428 = vset.pattern.permute.xlu0 0
      %429 = vperm.xlu0 %428, %v299
      %v430 = vpop.permute.xlu0 %429
      %433 = vset.pattern.permute.xlu0 0
      %434 = vperm.xlu0 %433, %v300
      %v435 = vpop.permute.xlu0 %434
      %438 = vset.pattern.permute.xlu0 0
      %439 = vperm.xlu0 %438, %v301
      %v440 = vpop.permute.xlu0 %439
      %443 = vset.pattern.permute.xlu0 0
      %444 = vperm.xlu0 %443, %v302
      %v445 = vpop.permute.xlu0 %444
      %448 = vset.pattern.permute.xlu0 0
      %449 = vperm.xlu0 %448, %v303
      %v450 = vpop.permute.xlu0 %449
      %453 = vset.pattern.permute.xlu0 0
      %454 = vperm.xlu0 %453, %v304
      %v455 = vpop.permute.xlu0 %454
      %458 = vset.pattern.permute.xlu0 0
      %459 = vperm.xlu0 %458, %v305
      %v460 = vpop.permute.xlu0 %459
      %463 = vset.pattern.permute.xlu0 0
      %464 = vperm.xlu0 %463, %v306
      %v465 = vpop.permute.xlu0 %464
      %v499 = vunpack.c.l.b16 %v227
      %v500 = vunpack.c.l.b16 %v228
      %v501 = vunpack.c.l.b16 %v229
      %v502 = vunpack.c.l.b16 %v230
      %v503 = vunpack.c.l.b16 %v231
      %v504 = vunpack.c.l.b16 %v232
      %v505 = vunpack.c.l.b16 %v233
      %v506 = vunpack.c.l.b16 %v234
      %v507 = vunpack.c.l.b16 %v235
      %v508 = vunpack.c.l.b16 %v236
      %v509 = vunpack.c.l.b16 %v237
      %v510 = vunpack.c.l.b16 %v238
      %v511 = vunpack.c.l.b16 %v239
      %v512 = vunpack.c.l.b16 %v240
      %v513 = vunpack.c.l.b16 %v241
      %v514 = vunpack.c.l.b16 %v242
      %v515 = vunpack.c.l.b16 %v243
      %v516 = vunpack.c.l.b16 %v244
      %v517 = vunpack.c.l.b16 %v245
      %v518 = vunpack.c.l.b16 %v246
      %v519 = vunpack.c.l.b16 %v247
      %v520 = vunpack.c.l.b16 %v248
      %v521 = vunpack.c.l.b16 %v249
      %v522 = vunpack.c.l.b16 %v250
      %v523 = vunpack.c.l.b16 %v251
      %v524 = vunpack.c.l.b16 %v252
      %v525 = vunpack.c.l.b16 %v253
      %v526 = vunpack.c.l.b16 %v254
      %v527 = vunpack.c.l.b16 %v255
      %v528 = vunpack.c.l.b16 %v256
      %v529 = vunpack.c.l.b16 %v257
      %v530 = vunpack.c.l.b16 %v258
      %v531 = vpack.c.b16 %v500, %v499
      %v532 = vpack.c.b16 %v502, %v501
      %v533 = vpack.c.b16 %v504, %v503
      %v534 = vpack.c.b16 %v506, %v505
      %v535 = vpack.c.b16 %v508, %v507
      %v536 = vpack.c.b16 %v510, %v509
      %v537 = vpack.c.b16 %v512, %v511
      %v538 = vpack.c.b16 %v514, %v513
      %v539 = vpack.c.b16 %v516, %v515
      %v540 = vpack.c.b16 %v518, %v517
      %v541 = vpack.c.b16 %v520, %v519
      %v542 = vpack.c.b16 %v522, %v521
      %v543 = vpack.c.b16 %v524, %v523
      %v544 = vpack.c.b16 %v526, %v525
      %v545 = vpack.c.b16 %v528, %v527
      %v546 = vpack.c.b16 %v530, %v529
      %v579 = vunpack.c.l.b16 %v259
      %v580 = vunpack.c.l.b16 %v260
      %v581 = vunpack.c.l.b16 %v261
      %v582 = vunpack.c.l.b16 %v262
      %v583 = vunpack.c.l.b16 %v263
      %v584 = vunpack.c.l.b16 %v264
      %v585 = vunpack.c.l.b16 %v265
      %v586 = vunpack.c.l.b16 %v266
      %v587 = vunpack.c.l.b16 %v267
      %v588 = vunpack.c.l.b16 %v268
      %v589 = vunpack.c.l.b16 %v269
      %v590 = vunpack.c.l.b16 %v270
      %v591 = vunpack.c.l.b16 %v271
      %v592 = vunpack.c.l.b16 %v272
      %v593 = vunpack.c.l.b16 %v273
      %v594 = vunpack.c.l.b16 %v274
      %v595 = vpack.c.b16 %v580, %v579
      %v596 = vpack.c.b16 %v582, %v581
      %v597 = vpack.c.b16 %v584, %v583
      %v598 = vpack.c.b16 %v586, %v585
      %v599 = vpack.c.b16 %v588, %v587
      %v600 = vpack.c.b16 %v590, %v589
      %v601 = vpack.c.b16 %v592, %v591
      %v602 = vpack.c.b16 %v594, %v593
      %611 = vmatprep.subr.bf16.mxu0 0
      %612 = vmatpush1.bf16.msra.mxu0 %v595
      %613 = vmatprep.subr.bf16.mxu0 0
      %614 = vmatpush1.bf16.msra.mxu0 %v596
      %615 = vmatprep.subr.bf16.mxu0 0
      %616 = vmatpush1.bf16.msra.mxu0 %v597
      %617 = vmatprep.subr.bf16.mxu0 0
      %618 = vmatpush1.bf16.msra.mxu0 %v598
      %619 = vmatprep.subr.bf16.mxu0 0
      %620 = vmatpush1.bf16.msra.mxu0 %v599
      %621 = vmatprep.subr.bf16.mxu0 0
      %622 = vmatpush1.bf16.msra.mxu0 %v600
      %623 = vmatprep.subr.bf16.mxu0 0
      %624 = vmatpush1.bf16.msra.mxu0 %v601
      %625 = vmatprep.subr.bf16.mxu0 0
      %626 = vmatpush1.bf16.msra.mxu0 %v602
      %627 = vmatprep.subr.bf16.mxu0 0
      %628 = vmatpush1.bf16.msra.mxu0 0
      %629 = vmatprep.subr.bf16.mxu0 0
      %630 = vmatpush1.bf16.msra.mxu0 0
      %631 = vmatprep.subr.bf16.mxu0 0
      %632 = vmatpush1.bf16.msra.mxu0 0
      %633 = vmatprep.subr.bf16.mxu0 0
      %634 = vmatpush1.bf16.msra.mxu0 0
      %635 = vmatprep.subr.bf16.mxu0 0
      %636 = vmatpush1.bf16.msra.mxu0 0
      %637 = vmatprep.subr.bf16.mxu0 0
      %638 = vmatpush1.bf16.msra.mxu0 0
      %639 = vmatprep.subr.bf16.mxu0 0
      %640 = vmatpush1.bf16.msra.mxu0 0
      %641 = vmatprep.subr.bf16.mxu0 0
      %642 = vmatpush1.bf16.msra.mxu0 0
      %643 = vmatprep.mubr.bf16.mxu0 0
      %644 = vmatmul.mubr.bf16.gmra.mrb[0].mxu0 %v531
      %v645 = vpop.f32.mrb[0].mxu0
      %v646 = vadd.f32 %v310, %v645
      %v647 = vpop.f32.mrb[0].mxu0
      %v648 = vpop.f32.mrb[0].mxu0
      %v649 = vadd.f32 %v315, %v648
      %v650 = vpop.f32.mrb[0].mxu0
      %651 = vmatprep.mubr.bf16.mxu0 0
      %652 = vmatmul.mubr.bf16.gmra.mrb[0].mxu0 %v532
      %v653 = vpop.f32.mrb[0].mxu0
      %v654 = vadd.f32 %v320, %v653
      %v655 = vpop.f32.mrb[0].mxu0
      %v656 = vpop.f32.mrb[0].mxu0
      %v657 = vadd.f32 %v325, %v656
      %v658 = vpop.f32.mrb[0].mxu0
      %659 = vmatprep.mubr.bf16.mxu0 0
      %660 = vmatmul.mubr.bf16.gmra.mrb[0].mxu0 %v533
      %v661 = vpop.f32.mrb[0].mxu0
      %v662 = vadd.f32 %v330, %v661
      %v663 = vpop.f32.mrb[0].mxu0
      %v664 = vpop.f32.mrb[0].mxu0
      %v665 = vadd.f32 %v335, %v664
      %v666 = vpop.f32.mrb[0].mxu0
      %667 = vmatprep.mubr.bf16.mxu0 0
      %668 = vmatmul.mubr.bf16.gmra.mrb[0].mxu0 %v534
      %v669 = vpop.f32.mrb[0].mxu0
      %v670 = vadd.f32 %v340, %v669
      %v671 = vpop.f32.mrb[0].mxu0
      %v672 = vpop.f32.mrb[0].mxu0
      %v673 = vadd.f32 %v345, %v672
      %v674 = vpop.f32.mrb[0].mxu0
      %675 = vmatprep.mubr.bf16.mxu0 0
      %676 = vmatmul.mubr.bf16.gmra.mrb[0].mxu0 %v535
      %v677 = vpop.f32.mrb[0].mxu0
      %v678 = vadd.f32 %v350, %v677
      %v679 = vpop.f32.mrb[0].mxu0
      %v680 = vpop.f32.mrb[0].mxu0
      %v681 = vadd.f32 %v355, %v680
      %v682 = vpop.f32.mrb[0].mxu0
      %683 = vmatprep.mubr.bf16.mxu0 0
      %684 = vmatmul.mubr.bf16.gmra.mrb[0].mxu0 %v536
      %v685 = vpop.f32.mrb[0].mxu0
      %v686 = vadd.f32 %v360, %v685
      %v687 = vpop.f32.mrb[0].mxu0
      %v688 = vpop.f32.mrb[0].mxu0
      %v689 = vadd.f32 %v365, %v688
      %v690 = vpop.f32.mrb[0].mxu0
      %691 = vmatprep.mubr.bf16.mxu0 0
      %692 = vmatmul.mubr.bf16.gmra.mrb[0].mxu0 %v537
      %v693 = vpop.f32.mrb[0].mxu0
      %v694 = vadd.f32 %v370, %v693
      %v695 = vpop.f32.mrb[0].mxu0
      %v696 = vpop.f32.mrb[0].mxu0
      %v697 = vadd.f32 %v375, %v696
      %v698 = vpop.f32.mrb[0].mxu0
      %699 = vmatprep.mubr.bf16.mxu0 0
      %700 = vmatmul.mubr.bf16.gmra.mrb[0].mxu0 %v538
      %v701 = vpop.f32.mrb[0].mxu0
      %v702 = vadd.f32 %v380, %v701
      %v703 = vpop.f32.mrb[0].mxu0
      %v704 = vpop.f32.mrb[0].mxu0
      %v705 = vadd.f32 %v385, %v704
      %v706 = vpop.f32.mrb[0].mxu0
      %707 = vmatprep.mubr.bf16.mxu0 0
      %708 = vmatmul.mubr.bf16.gmra.mrb[0].mxu0 %v539
      %v709 = vpop.f32.mrb[0].mxu0
      %v710 = vadd.f32 %v390, %v709
      %v711 = vpop.f32.mrb[0].mxu0
      %v712 = vpop.f32.mrb[0].mxu0
      %v713 = vadd.f32 %v395, %v712
      %v714 = vpop.f32.mrb[0].mxu0
      %715 = vmatprep.mubr.bf16.mxu0 0
      %716 = vmatmul.mubr.bf16.gmra.mrb[0].mxu0 %v540
      %v717 = vpop.f32.mrb[0].mxu0
      %v718 = vadd.f32 %v400, %v717
      %v719 = vpop.f32.mrb[0].mxu0
      %v720 = vpop.f32.mrb[0].mxu0
      %v721 = vadd.f32 %v405, %v720
      %v722 = vpop.f32.mrb[0].mxu0
      %723 = vmatprep.mubr.bf16.mxu0 0
      %724 = vmatmul.mubr.bf16.gmra.mrb[0].mxu0 %v541
      %v725 = vpop.f32.mrb[0].mxu0
      %v726 = vadd.f32 %v410, %v725
      %v727 = vpop.f32.mrb[0].mxu0
      %v728 = vpop.f32.mrb[0].mxu0
      %v729 = vadd.f32 %v415, %v728
      %v730 = vpop.f32.mrb[0].mxu0
      %731 = vmatprep.mubr.bf16.mxu0 0
      %732 = vmatmul.mubr.bf16.gmra.mrb[0].mxu0 %v542
      %v733 = vpop.f32.mrb[0].mxu0
      %v734 = vadd.f32 %v420, %v733
      %v735 = vpop.f32.mrb[0].mxu0
      %v736 = vpop.f32.mrb[0].mxu0
      %v737 = vadd.f32 %v425, %v736
      %v738 = vpop.f32.mrb[0].mxu0
      %739 = vmatprep.mubr.bf16.mxu0 0
      %740 = vmatmul.mubr.bf16.gmra.mrb[0].mxu0 %v543
      %v741 = vpop.f32.mrb[0].mxu0
      %v742 = vadd.f32 %v430, %v741
      %v743 = vpop.f32.mrb[0].mxu0
      %v744 = vpop.f32.mrb[0].mxu0
      %v745 = vadd.f32 %v435, %v744
      %v746 = vpop.f32.mrb[0].mxu0
      %747 = vmatprep.mubr.bf16.mxu0 0
      %748 = vmatmul.mubr.bf16.gmra.mrb[0].mxu0 %v544
      %v749 = vpop.f32.mrb[0].mxu0
      %v750 = vadd.f32 %v440, %v749
      %v751 = vpop.f32.mrb[0].mxu0
      %v752 = vpop.f32.mrb[0].mxu0
      %v753 = vadd.f32 %v445, %v752
      %v754 = vpop.f32.mrb[0].mxu0
      %755 = vmatprep.mubr.bf16.mxu0 0
      %756 = vmatmul.mubr.bf16.gmra.mrb[0].mxu0 %v545
      %v757 = vpop.f32.mrb[0].mxu0
      %v758 = vadd.f32 %v450, %v757
      %v759 = vpop.f32.mrb[0].mxu0
      %v760 = vpop.f32.mrb[0].mxu0
      %v761 = vadd.f32 %v455, %v760
      %v762 = vpop.f32.mrb[0].mxu0
      %763 = vmatprep.mubr.bf16.mxu0 0
      %764 = vmatmul.mubr.bf16.gmra.mrb[0].mxu0 %v546
      %v765 = vpop.f32.mrb[0].mxu0
      %v766 = vadd.f32 %v460, %v765
      %v767 = vpop.f32.mrb[0].mxu0
      %v768 = vpop.f32.mrb[0].mxu0
      %v769 = vadd.f32 %v465, %v768
      %v770 = vpop.f32.mrb[0].mxu0
      %771 = vdwg.mxu0
      %v772 = vld [vmem:[#allocation2] sm:$0x1]
      %v773 = vmax.f32 %v646, %v662
      %v774 = vmax.f32 %v649, %v665
      %v775 = vmax.f32 %v654, %v670
      %v776 = vmax.f32 %v657, %v673
      %v777 = vmax.f32 %v773, %v678
      %v778 = vmax.f32 %v774, %v681
      %v779 = vmax.f32 %v775, %v686
      %v780 = vmax.f32 %v776, %v689
      %v781 = vmax.f32 %v777, %v694
      %v782 = vmax.f32 %v778, %v697
      %v783 = vmax.f32 %v779, %v702
      %v784 = vmax.f32 %v780, %v705
      %v785 = vmax.f32 %v781, %v710
      %v786 = vmax.f32 %v782, %v713
      %v787 = vmax.f32 %v783, %v718
      %v788 = vmax.f32 %v784, %v721
      %v789 = vmax.f32 %v785, %v726
      %v790 = vmax.f32 %v786, %v729
      %v791 = vmax.f32 %v787, %v734
      %v792 = vmax.f32 %v788, %v737
      %v793 = vmax.f32 %v789, %v742
      %v794 = vmax.f32 %v790, %v745
      %v795 = vmax.f32 %v791, %v750
      %v796 = vmax.f32 %v792, %v753
      %v797 = vmax.f32 %v793, %v758
      %v798 = vmax.f32 %v794, %v761
      %v799 = vmax.f32 %v795, %v766
      %v800 = vmax.f32 %v796, %v769
      %v801 = vmax.f32 %v797, %v798
      %v802 = vmax.f32 %v799, %v800
      %v803 = vmax.f32 %v801, %v802
      %v804 = vrot.slane %v803, 4
      %v805 = vmax.f32 %v803, %v804
      %v806 = vrot.slane %v805, 2
      %v807 = vmax.f32 %v805, %v806
      %v808 = vrot.slane %v807, 1
      %v809 = vmax.f32 %v807, %v808
      %v810 = vmax.f32 %v772, %v809
      %v811 = vsub.f32 %v772, %v810
      %v812 = vmul.f32 %v811, 1.442695
      %v813 = vpow.pop %v812
      %v814 = vld [vmem:[#allocation2 + $0x1] sm:$0x1]
      %v815 = vmul.f32 %v813, %v814
      %v816 = vlaneseq
      %v817 = vshrl.u32 %v816, 7
      %v818 = vsub.s32 0, %v817
      %v819 = vrot.slane %v810, %v818
      %v820 = vsub.f32 %v646, %v819
      %v821 = vsub.f32 %v649, %v819
      %v822 = vsub.f32 %v654, %v819
      %v823 = vsub.f32 %v657, %v819
      %v824 = vsub.f32 %v662, %v819
      %v825 = vsub.f32 %v665, %v819
      %v826 = vsub.f32 %v670, %v819
      %v827 = vsub.f32 %v673, %v819
      %v828 = vsub.f32 %v678, %v819
      %v829 = vsub.f32 %v681, %v819
      %v830 = vsub.f32 %v686, %v819
      %v831 = vsub.f32 %v689, %v819
      %v832 = vsub.f32 %v694, %v819
      %v833 = vsub.f32 %v697, %v819
      %v834 = vsub.f32 %v702, %v819
      %v835 = vsub.f32 %v705, %v819
      %v836 = vsub.f32 %v710, %v819
      %v837 = vsub.f32 %v713, %v819
      %v838 = vsub.f32 %v718, %v819
      %v839 = vsub.f32 %v721, %v819
      %v840 = vsub.f32 %v726, %v819
      %v841 = vsub.f32 %v729, %v819
      %v842 = vsub.f32 %v734, %v819
      %v843 = vsub.f32 %v737, %v819
      %v844 = vsub.f32 %v742, %v819
      %v845 = vsub.f32 %v745, %v819
      %v846 = vsub.f32 %v750, %v819
      %v847 = vsub.f32 %v753, %v819
      %v848 = vsub.f32 %v758, %v819
      %v849 = vsub.f32 %v761, %v819
      %v850 = vsub.f32 %v766, %v819
      %v851 = vsub.f32 %v769, %v819
      %v852 = vmul.f32 %v820, 1.442695
      %v853 = vpow.pop %v852
      %v854 = vmul.f32 %v821, 1.442695
      %v855 = vpow.pop %v854
      %v856 = vmul.f32 %v822, 1.442695
      %v857 = vpow.pop %v856
      %v858 = vmul.f32 %v823, 1.442695
      %v859 = vpow.pop %v858
      %v860 = vmul.f32 %v824, 1.442695
      %v861 = vpow.pop %v860
      %v862 = vmul.f32 %v825, 1.442695
      %v863 = vpow.pop %v862
      %v864 = vmul.f32 %v826, 1.442695
      %v865 = vpow.pop %v864
      %v866 = vmul.f32 %v827, 1.442695
      %v867 = vpow.pop %v866
      %v868 = vmul.f32 %v828, 1.442695
      %v869 = vpow.pop %v868
      %v870 = vmul.f32 %v829, 1.442695
      %v871 = vpow.pop %v870
      %v872 = vmul.f32 %v830, 1.442695
      %v873 = vpow.pop %v872
      %v874 = vmul.f32 %v831, 1.442695
      %v875 = vpow.pop %v874
      %v876 = vmul.f32 %v832, 1.442695
      %v877 = vpow.pop %v876
      %v878 = vmul.f32 %v833, 1.442695
      %v879 = vpow.pop %v878
      %v880 = vmul.f32 %v834, 1.442695
      %v881 = vpow.pop %v880
      %v882 = vmul.f32 %v835, 1.442695
      %v883 = vpow.pop %v882
      %v884 = vmul.f32 %v836, 1.442695
      %v885 = vpow.pop %v884
      %v886 = vmul.f32 %v837, 1.442695
      %v887 = vpow.pop %v886
      %v888 = vmul.f32 %v838, 1.442695
      %v889 = vpow.pop %v888
      %v890 = vmul.f32 %v839, 1.442695
      %v891 = vpow.pop %v890
      %v892 = vmul.f32 %v840, 1.442695
      %v893 = vpow.pop %v892
      %v894 = vmul.f32 %v841, 1.442695
      %v895 = vpow.pop %v894
      %v896 = vmul.f32 %v842, 1.442695
      %v897 = vpow.pop %v896
      %v898 = vmul.f32 %v843, 1.442695
      %v899 = vpow.pop %v898
      %v900 = vmul.f32 %v844, 1.442695
      %v901 = vpow.pop %v900
      %v902 = vmul.f32 %v845, 1.442695
      %v903 = vpow.pop %v902
      %v904 = vmul.f32 %v846, 1.442695
      %v905 = vpow.pop %v904
      %v906 = vmul.f32 %v847, 1.442695
      %v907 = vpow.pop %v906
      %v908 = vmul.f32 %v848, 1.442695
      %v909 = vpow.pop %v908
      %v910 = vmul.f32 %v849, 1.442695
      %v911 = vpow.pop %v910
      %v912 = vmul.f32 %v850, 1.442695
      %v913 = vpow.pop %v912
      %v914 = vmul.f32 %v851, 1.442695
      %v915 = vpow.pop %v914
      %v916 = vadd.f32 %v853, %v855
      %v917 = vadd.f32 %v916, %v857
      %v918 = vadd.f32 %v917, %v859
      %v919 = vadd.f32 %v918, %v861
      %v920 = vadd.f32 %v919, %v863
      %v921 = vadd.f32 %v920, %v865
      %v922 = vadd.f32 %v921, %v867
      %v923 = vadd.f32 %v922, %v869
      %v924 = vadd.f32 %v923, %v871
      %v925 = vadd.f32 %v924, %v873
      %v926 = vadd.f32 %v925, %v875
      %v927 = vadd.f32 %v926, %v877
      %v928 = vadd.f32 %v927, %v879
      %v929 = vadd.f32 %v928, %v881
      %v930 = vadd.f32 %v929, %v883
      %v931 = vadd.f32 %v930, %v885
      %v932 = vadd.f32 %v931, %v887
      %v933 = vadd.f32 %v932, %v889
      %v934 = vadd.f32 %v933, %v891
      %v935 = vadd.f32 %v934, %v893
      %v936 = vadd.f32 %v935, %v895
      %v937 = vadd.f32 %v936, %v897
      %v938 = vadd.f32 %v937, %v899
      %v939 = vadd.f32 %v938, %v901
      %v940 = vadd.f32 %v939, %v903
      %v941 = vadd.f32 %v940, %v905
      %v942 = vadd.f32 %v941, %v907
      %v943 = vadd.f32 %v942, %v909
      %v944 = vadd.f32 %v943, %v911
      %v945 = vadd.f32 %v944, %v913
      %v946 = vadd.f32 %v945, %v915
      %v947 = vrot.slane %v946, 4
      %v948 = vadd.f32 %v946, %v947
      %v949 = vrot.slane %v948, 2
      %v950 = vadd.f32 %v948, %v949
      %v951 = vrot.slane %v950, 1
      %v952 = vadd.f32 %v950, %v951
      %v953 = vadd.f32 %v815, %v952
      %954 = vst [vmem:[#allocation2 + $0x1] sm:$0x1] %v953
      %955 = vst [vmem:[#allocation2] sm:$0x1] %v810
      %p956 = scmp.eq.s32.totalorder %s19, 1
      // Predicated region
      $region37: #{forward.1} parent=31 // pred_check
        %p957 = pneg %p956
      $region38: #{forward.1} parent=31 // pred_check_branch
        %959 = sbr.rel (%p957) target = $region40
      $region39: #{forward.1} parent=31 // pred_region
        %v960 = vld [vmem:[#allocation2] sm:$0x1]
        %v961 = vld [vmem:[#allocation2 + $0x1] sm:$0x1]
        %v962 = vlog2.pop %v961
        %v963 = vmul.f32 %v962, 0.6931472
        %v964 = vadd.f32 %v960, %v963
        %965 = vst [vmem:[%s219] sm:$0x1] %v964
      $region40: #{forward.1} parent=31 // pred_fallthru
        _
      %p966 = scmp.lt.s32.totalorder %s18, 0
      %s967 = scalar_select %p966, %s18, 0
      %s968 = scalar_lea.vmem %s3, %s967
      // Predicated region
      $region41: #{forward.1} parent=31 // pred_check
        %p969 = pneg %p122
      $region42: #{forward.1} parent=31 // pred_check_branch
        %971 = sbr.rel (%p969) target = $region44
      $region43: #{forward.1} parent=31 // pred_region
        _
      $region44: #{forward.1} parent=31 // pred_fallthru
        _
      // Predicated region
      $region45: #{forward.1} parent=31 // pred_check
        %p972 = pneg %p122
      $region46: #{forward.1} parent=31 // pred_check_branch
        %974 = sbr.rel (%p972) target = $region48
      $region47: #{forward.1} parent=31 // pred_region
        %p975 = scmp.lt.s32.totalorder %s18, 0
        %s976 = scalar_select %p975, %s18, 0
        %s977 = scalar_lea.vmem %s3, %s976
      $region48: #{forward.1} parent=31 // pred_fallthru
        _
    $region32: #{forward.1} parent=5 // pred_fallthru
      _
    %p978 = scmp.le.s32.totalorder 2, %s9
    // Predicated region
    $region49: #{forward.1} parent=5 // pred_check
      %p979 = pneg %p978
    $region50: #{forward.1} parent=5 // pred_check_branch
      %981 = sbr.rel (%p979) target = $region52
    $region51: #{forward.1} parent=5 // pred_region
      %s982 = ssub.s32 %s9, 2
    $region52: #{forward.1} parent=5 // pred_fallthru
      _
  $region6: #{forward.1} parent=0 // loop_footer
    %s13 = sadd.s32 1, %s9
  $region7: #{forward.1} parent=0 // loop_footer_branch
    %8 = sbr.rel target = $region3
  $region8: #{forward.1} parent=0 // loop_exit
    _

</llo_original>
